<compile_context>
chip_gen: v6e
topology: v6e:2x2x1
jax: 0.10.0
libtpu: 0.0.40
codegen_flags: <defaults>
</compile_context>

<pallas_src>
import functools

import jax
import jax.numpy as jnp
import numpy as np
from jax.experimental import pallas as pl
from jax.experimental.pallas import tpu as pltpu

_COLOUR_CODES = {"none": 0, "red": 1, "blue": 2}
_NONE_CODE = _COLOUR_CODES["none"]


# ---------------------------------------------------------------------------
# Host-side (static-config) colour bookkeeping — mirrors ColourClassInfo
# ---------------------------------------------------------------------------
class ColourClassInfo:
    def __init__(self, class_to_idx):
        self.class_to_idx = class_to_idx
        self.idx_to_class = {v: k for k, v in class_to_idx.items()}
        self.idx_to_colour = {}
        for class_name, idx in class_to_idx.items():
            if "red" in class_name.lower():
                self.idx_to_colour[idx] = "red"
            elif "blue" in class_name.lower():
                self.idx_to_colour[idx] = "blue"
            else:
                self.idx_to_colour[idx] = "none"


# ---------------------------------------------------------------------------
# Pallas kernel: one batch tile -> per-tile partial (ce, hsv) sums
# ---------------------------------------------------------------------------
def _hybrid_loss_kernel(meta_ref, logits_ref, ce_ref, hsv_ref, *, ragged):
    # meta columns: 0 = label (small int stored exactly in f32),
    #               1 = CE weight (1.0 real row / 0.0 padded row),
    #               2 = hsv weight (colour-match * confidence, 0.0 when padded).
    labels_i = meta_ref[:, 0:1].astype(jnp.int32)            # (TB, 1)
    ce_w = meta_ref[:, 1:2]                                   # (TB, 1)
    hsv_w = meta_ref[:, 2:3]                                  # (TB, 1)

    # Upcast once right after the VMEM load; math stays f32 (v5e has no bf16 VPU/EUP).
    logits = logits_ref[...].astype(jnp.float32)              # (TB, C)

    m = jnp.max(logits, axis=-1, keepdims=True)               # (TB, 1)
    z = logits - m
    if ragged:
        # The last tile reads past the end of the (unpadded) logits array; those rows
        # hold unspecified HBM data.  Select (not multiply) so NaN/Inf can never reach
        # exp() or the weighted sums.  ce_w / hsv_w are already 0 on those rows.
        z = jnp.where(ce_w > 0.0, z, 0.0)

    # picked_z[i] = z[i, labels[i]] via compare + select (no one-hot cast / multiply);
    # full logp is never materialised.
    col = jax.lax.broadcasted_iota(jnp.int32, z.shape, 1)
    picked_z = jnp.sum(jnp.where(col == labels_i, z, 0.0), axis=-1, keepdims=True)
    lse = jnp.log(jnp.sum(jnp.exp(z), axis=-1, keepdims=True))
    picked = picked_z - lse                                   # (TB, 1) = logp[i, y_i]

    ce_part = -jnp.sum(ce_w * picked)       # sum_i -logp[i, y_i]            (valid rows)
    hsv_part = -jnp.sum(hsv_w * picked)     # sum_i -match_i*conf_i*logp[i, y_i]

    # Lane-dense (1, 1, 128) broadcast partials; the tiny final reduce happens in XLA.
    ce_ref[...] = jnp.full(ce_ref.shape, ce_part, jnp.float32)
    hsv_ref[...] = jnp.full(hsv_ref.shape, hsv_part, jnp.float32)


# ---------------------------------------------------------------------------
# Tile sizing (generation-aware) + wrapper
# ---------------------------------------------------------------------------
def _choose_tile_and_vmem(batch, num_classes, itemsize):
    """Pick the batch-tile size and scoped-VMEM limit from the chip's VMEM capacity."""
    try:
        cap = int(getattr(pltpu.get_tpu_info(), "vmem_capacity_bytes", 0)) or 64 * 1024 * 1024
    except Exception:  # pragma: no cover — e.g. interpret mode
        cap = 64 * 1024 * 1024
    if cap >= 96 * 1024 * 1024:          # v5e / v6e: 128 MiB physical VMEM
        vmem_limit = 80 * 1024 * 1024
    else:                                # v7x: 64 MiB per TensorCore
        vmem_limit = 44 * 1024 * 1024
    # Per-row VMEM model: 2 pipelined logits buffers (input dtype) + ~3 f32 (tb, C)
    # temporaries + the (tb, 3) meta column lane-padded to (tb, 128) x 2 buffers.
    bytes_per_row = num_classes * (2 * itemsize + 3 * 4) + 2 * 128 * 4
    tb = (vmem_limit // 2) // max(1, bytes_per_row)
    tb = max(64, min(8192, (tb // 64) * 64))
    if batch <= tb:
        return batch, vmem_limit         # single block == full array (no (8,128) rule issue)
    return tb, vmem_limit


@functools.partial(jax.jit, static_argnames=("hsv_weight", "tile_b"))
def _hybrid_loss_device(outputs, labels, detected_codes, confidences, colour_lut,
                        hsv_weight=0.3, tile_b=None):
    B, C = outputs.shape
    labels = labels.astype(jnp.int32)

    # On-device colour-match mask (no host round-trip), fused with the confidence.
    expected = jnp.take(colour_lut, labels)                                   # (B,)
    match = (expected == detected_codes) & (detected_codes != _NONE_CODE)
    hsv_w = match.astype(jnp.float32) * confidences.astype(jnp.float32)       # (B,)

    tb, vmem_limit = _choose_tile_and_vmem(B, C, outputs.dtype.itemsize)
    if tile_b is not None:               # test / sweep override
        tb = min(int(tile_b), B)
        if tb < B:
            tb = max(8, (tb // 8) * 8)
    num_tiles = (B + tb - 1) // tb
    b_pad = num_tiles * tb
    ragged = b_pad != B                   # static: kernel only sanitises rows when needed

    # Single narrow side-band array: [label, ce-weight (valid), hsv-weight] per row.
    # Only this tiny array is padded; the (B, C) logits stream unpadded from HBM.
    meta = jnp.stack([labels.astype(jnp.float32),
                      jnp.ones((B,), jnp.float32),
                      hsv_w], axis=1)                                         # (B, 3)
    if ragged:
        meta = jnp.pad(meta, ((0, b_pad - B), (0, 0)))

    kernel = functools.partial(_hybrid_loss_kernel, ragged=ragged)
    ce_parts, hsv_parts = pl.pallas_call(
        kernel,
        grid=(num_tiles,),
        in_specs=[
            pl.BlockSpec((tb, 3), lambda i: (i, 0)),    # fused label/weight column
            pl.BlockSpec((tb, C), lambda i: (i, 0)),    # logits tile (bf16 or f32)
        ],
        out_specs=(
            pl.BlockSpec((1, 1, 128), lambda i: (i, 0, 0)),
            pl.BlockSpec((1, 1, 128), lambda i: (i, 0, 0)),
        ),
        out_shape=(
            jax.ShapeDtypeStruct((num_tiles, 1, 128), jnp.float32),
            jax.ShapeDtypeStruct((num_tiles, 1, 128), jnp.float32),
        ),
        compiler_params=pltpu.CompilerParams(
            dimension_semantics=("parallel",),
            vmem_limit_bytes=int(vmem_limit),
        ),
    )(meta, outputs)

    ce = jnp.sum(ce_parts[:, 0, 0]) / B
    hsv = jnp.sum(hsv_parts[:, 0, 0]) / B
    total = (1.0 - hsv_weight) * ce + hsv_weight * hsv
    return total, ce, hsv


def hybrid_loss(outputs, labels, images, hsv_colours, hsv_confidences,
                colour_class_info, hsv_weight=0.3, tile_b=None):
    """JAX/Pallas equivalent of HybridLoss.forward.

    outputs:          (B, C) logits (f32 or bf16; bf16 halves HBM traffic)
    labels:           (B,)   int class indices
    images:           unused by the loss (kept for signature parity)
    hsv_colours:      list[str] of detected colours, or int32[B] colour codes
    hsv_confidences:  (B,) float confidences
    """
    del images  # not used by the loss math

    num_classes = outputs.shape[1]
    # Static config -> idx->colour-code LUT (built from python config, never device data).
    lut = [_COLOUR_CODES.get(colour_class_info.idx_to_colour.get(i, "none"), _NONE_CODE)
           for i in range(num_classes)]
    colour_lut = jnp.asarray(lut, jnp.int32)

    if isinstance(hsv_colours, (list, tuple)):
        detected_codes = jnp.asarray(
            [_COLOUR_CODES.get(c, _NONE_CODE) for c in hsv_colours], jnp.int32)
    else:
        detected_codes = jnp.asarray(hsv_colours, jnp.int32)

    confidences = jnp.asarray(hsv_confidences, jnp.float32)
    return _hybrid_loss_device(outputs, labels, detected_codes, confidences, colour_lut,
                               hsv_weight=float(hsv_weight),
                               tile_b=None if tile_b is None else int(tile_b))


# ---------------------------------------------------------------------------
# Pure-JAX reference (same forward semantics as HybridLoss.forward)
# ---------------------------------------------------------------------------
def _reference_loss(outputs, labels, detected_codes, confidences, colour_lut, hsv_weight):
    logp = jax.nn.log_softmax(outputs.astype(jnp.float32), axis=-1)
    picked = jnp.take_along_axis(logp, labels.astype(jnp.int32)[:, None], axis=-1)[:, 0]
    ce = -jnp.mean(picked)
    expected = jnp.take(colour_lut, labels.astype(jnp.int32))
    match = ((expected == detected_codes) & (detected_codes != _NONE_CODE)).astype(jnp.float32)
    hsv = -jnp.sum(match * confidences.astype(jnp.float32) * picked) / outputs.shape[0]
    total = (1.0 - hsv_weight) * ce + hsv_weight * hsv
    return total, ce, hsv


# ---------------------------------------------------------------------------
# Example run / self-test
# ---------------------------------------------------------------------------
if __name__ == "__main__":
    key = jax.random.PRNGKey(0)
    keys = jax.random.split(key, 8)

    # ----- Test 1: module-sized demo (B=4, C=4, bf16 logits, single full-array tile) -----
    batch_size, num_classes = 4, 4
    class_to_idx = {"red_apple": 0, "blue_sky": 1, "green_leaf": 2, "blue_car": 3}
    info = ColourClassInfo(class_to_idx)

    outputs = jax.random.normal(keys[0], (batch_size, num_classes), jnp.float32).astype(jnp.bfloat16)
    labels = jax.random.randint(keys[1], (batch_size,), 0, num_classes, jnp.int32)
    images = jax.random.normal(keys[2], (batch_size, 3, 32, 32), jnp.float32)  # unused by loss
    hsv_conf = jax.random.uniform(keys[3], (batch_size,), jnp.float32)
    hsv_colours = ["red", "blue", "none", "blue"]   # detector output (host strings)

    total, ce, hsv = hybrid_loss(outputs, labels, images, hsv_colours, hsv_conf, info,
                                 hsv_weight=0.3)
    jax.block_until_ready((total, ce, hsv))

    lut1 = jnp.asarray([_COLOUR_CODES.get(info.idx_to_colour.get(i, "none"), _NONE_CODE)
                        for i in range(num_classes)], jnp.int32)
    det1 = jnp.asarray([_COLOUR_CODES.get(c, _NONE_CODE) for c in hsv_colours], jnp.int32)
    t_r, ce_r, hsv_r = _reference_loss(outputs, labels, det1, hsv_conf, lut1, 0.3)
    np.testing.assert_allclose(np.asarray(ce), np.asarray(ce_r), rtol=1e-5, atol=1e-5)
    np.testing.assert_allclose(np.asarray(hsv), np.asarray(hsv_r), rtol=1e-5, atol=1e-5)
    np.testing.assert_allclose(np.asarray(total), np.asarray(t_r), rtol=1e-5, atol=1e-5)

    # ----- Test 2: larger class count + ragged last tile (B=200, C=384, f32, tb=64) -----
    B2, C2 = 200, 384
    class_to_idx2 = {}
    for i in range(C2):
        base = ("red", "blue", "green")[i % 3]
        class_to_idx2["%s_obj%d" % (base, i)] = i
    info2 = ColourClassInfo(class_to_idx2)

    outputs2 = jax.random.normal(keys[4], (B2, C2), jnp.float32)
    labels2 = jax.random.randint(keys[5], (B2,), 0, C2, jnp.int32)
    conf2 = jax.random.uniform(keys[6], (B2,), jnp.float32)
    det2 = jax.random.randint(keys[7], (B2,), 0, 3, jnp.int32)   # pre-encoded colour codes

    total2, ce2, hsv2 = hybrid_loss(outputs2, labels2, None, det2, conf2, info2,
                                    hsv_weight=0.25, tile_b=64)  # forces 4 tiles, ragged tail
    jax.block_until_ready((total2, ce2, hsv2))

    lut2 = jnp.asarray([_COLOUR_CODES.get(info2.idx_to_colour.get(i, "none"), _NONE_CODE)
                        for i in range(C2)], jnp.int32)
    t_r2, ce_r2, hsv_r2 = _reference_loss(outputs2, labels2, det2, conf2, lut2, 0.25)
    np.testing.assert_allclose(np.asarray(ce2), np.asarray(ce_r2), rtol=2e-5, atol=2e-5)
    np.testing.assert_allclose(np.asarray(hsv2), np.asarray(hsv_r2), rtol=2e-5, atol=2e-5)
    np.testing.assert_allclose(np.asarray(total2), np.asarray(t_r2), rtol=2e-5, atol=2e-5)

    print("KERNEL_OK")
</pallas_src>

<mosaic_0001>
module attributes {stable_mosaic.version = 11 : i64} {
  func.func @_hybrid_loss_kernel(%arg0: i32, %arg1: memref<4x3xf32, #tpu.memory_space<vmem>>, %arg2: memref<4x4xbf16, #tpu.memory_space<vmem>>, %arg3: memref<1x1x128xf32, #tpu.memory_space<vmem>>, %arg4: memref<1x1x128xf32, #tpu.memory_space<vmem>>) attributes {dimension_semantics = [#tpu.dimension_semantics<parallel>], iteration_bounds = array<i64: 1>, scalar_prefetch = 0 : i64, scratch_operands = 0 : i64, tpu.core_type = #tpu.core_type<tc>, window_params = [{transform_indices = @transform_0, window_bounds = array<i64: 4, 3>}, {transform_indices = @transform_1, window_bounds = array<i64: 4, 4>}, {transform_indices = @transform_2, window_bounds = array<i64: 1, 1, 128>}, {transform_indices = @transform_3, window_bounds = array<i64: 1, 1, 128>}]} {
    %c0 = arith.constant 0 : index
    %c0_0 = arith.constant 0 : index
    %0 = vector.load %arg1[%c0, %c0_0] : memref<4x3xf32, #tpu.memory_space<vmem>>, vector<4x1xf32>
    %1 = arith.fptosi %0 : vector<4x1xf32> to vector<4x1xi32>
    %c0_1 = arith.constant 0 : index
    %c1 = arith.constant 1 : index
    %2 = vector.load %arg1[%c0_1, %c1] : memref<4x3xf32, #tpu.memory_space<vmem>>, vector<4x1xf32>
    %c0_2 = arith.constant 0 : index
    %c2 = arith.constant 2 : index
    %3 = vector.load %arg1[%c0_2, %c2] : memref<4x3xf32, #tpu.memory_space<vmem>>, vector<4x1xf32>
    %c0_3 = arith.constant 0 : index
    %c0_4 = arith.constant 0 : index
    %4 = vector.load %arg2[%c0_3, %c0_4] : memref<4x4xbf16, #tpu.memory_space<vmem>>, vector<4x4xbf16>
    %5 = arith.extf %4 : vector<4x4xbf16> to vector<4x4xf32>
    %cst = arith.constant dense<0xFF800000> : vector<4xf32>
    %6 = vector.multi_reduction <maximumf>, %5, %cst [1] : vector<4x4xf32> to vector<4xf32>
    %7 = vector.shape_cast %6 : vector<4xf32> to vector<4x1xf32>
    %8 = vector.broadcast %7 : vector<4x1xf32> to vector<4x4xf32>
    %9 = arith.subf %5, %8 : vector<4x4xf32>
    %10 = tpu.iota {dimensions = array<i32: 1>} : vector<4x4xi32>
    %11 = vector.broadcast %1 : vector<4x1xi32> to vector<4x4xi32>
    %12 = arith.cmpi eq, %10, %11 : vector<4x4xi32>
    %cst_5 = arith.constant 0.000000e+00 : f32
    %13 = vector.broadcast %cst_5 : f32 to vector<4x4xf32>
    %14 = arith.select %12, %9, %13 : vector<4x4xi1>, vector<4x4xf32>
    %cst_6 = arith.constant dense<0.000000e+00> : vector<4xf32>
    %15 = vector.multi_reduction <add>, %14, %cst_6 [1] : vector<4x4xf32> to vector<4xf32>
    %16 = vector.shape_cast %15 : vector<4xf32> to vector<4x1xf32>
    %17 = math.exp %9 : vector<4x4xf32>
    %cst_7 = arith.constant dense<0.000000e+00> : vector<4xf32>
    %18 = vector.multi_reduction <add>, %17, %cst_7 [1] : vector<4x4xf32> to vector<4xf32>
    %19 = vector.shape_cast %18 : vector<4xf32> to vector<4x1xf32>
    %20 = math.log %19 : vector<4x1xf32>
    %21 = arith.subf %16, %20 : vector<4x1xf32>
    %22 = arith.mulf %2, %21 : vector<4x1xf32>
    %23 = vector.shape_cast %22 : vector<4x1xf32> to vector<1x4x1xf32>
    %cst_8 = arith.constant dense<0.000000e+00> : vector<1xf32>
    %24 = vector.multi_reduction <add>, %23, %cst_8 [1, 2] : vector<1x4x1xf32> to vector<1xf32>
    %25 = vector.shape_cast %24 : vector<1xf32> to vector<1x1x1xf32>
    %26 = vector.extract %25[0, 0, 0] : f32 from vector<1x1x1xf32>
    %cst_9 = arith.constant 0.000000e+00 : f32
    %27 = arith.subf %cst_9, %26 : f32
    %28 = arith.mulf %3, %21 : vector<4x1xf32>
    %29 = vector.shape_cast %28 : vector<4x1xf32> to vector<1x4x1xf32>
    %cst_10 = arith.constant dense<0.000000e+00> : vector<1xf32>
    %30 = vector.multi_reduction <add>, %29, %cst_10 [1, 2] : vector<1x4x1xf32> to vector<1xf32>
    %31 = vector.shape_cast %30 : vector<1xf32> to vector<1x1x1xf32>
    %32 = vector.extract %31[0, 0, 0] : f32 from vector<1x1x1xf32>
    %cst_11 = arith.constant 0.000000e+00 : f32
    %33 = arith.subf %cst_11, %32 : f32
    %34 = vector.broadcast %27 : f32 to vector<1x1x128xf32>
    %c0_12 = arith.constant 0 : index
    %c0_13 = arith.constant 0 : index
    %c0_14 = arith.constant 0 : index
    %35 = vector.load %arg3[%c0_12, %c0_13, %c0_14] : memref<1x1x128xf32, #tpu.memory_space<vmem>>, vector<1x1x128xf32>
    tpu.vector_store %arg3[%c0_12, %c0_13, %c0_14], %34 {strides = array<i32>} : memref<1x1x128xf32, #tpu.memory_space<vmem>>, vector<1x1x128xf32>,
    %36 = vector.broadcast %33 : f32 to vector<1x1x128xf32>
    %c0_15 = arith.constant 0 : index
    %c0_16 = arith.constant 0 : index
    %c0_17 = arith.constant 0 : index
    %37 = vector.load %arg4[%c0_15, %c0_16, %c0_17] : memref<1x1x128xf32, #tpu.memory_space<vmem>>, vector<1x1x128xf32>
    tpu.vector_store %arg4[%c0_15, %c0_16, %c0_17], %36 {strides = array<i32>} : memref<1x1x128xf32, #tpu.memory_space<vmem>>, vector<1x1x128xf32>,
    return
  }
  func.func @transform_0(%arg0: i32) -> (i32, i32) {
    %c0_i32 = arith.constant 0 : i32
    %c0_i32_0 = arith.constant 0 : i32
    return %arg0, %c0_i32 : i32, i32
  }
  func.func @transform_1(%arg0: i32) -> (i32, i32) {
    %c0_i32 = arith.constant 0 : i32
    %c0_i32_0 = arith.constant 0 : i32
    return %arg0, %c0_i32 : i32, i32
  }
  func.func @transform_2(%arg0: i32) -> (i32, i32, i32) {
    %c0_i32 = arith.constant 0 : i32
    %c0_i32_0 = arith.constant 0 : i32
    %c0_i32_1 = arith.constant 0 : i32
    return %arg0, %c0_i32, %c0_i32_0 : i32, i32, i32
  }
  func.func @transform_3(%arg0: i32) -> (i32, i32, i32) {
    %c0_i32 = arith.constant 0 : i32
    %c0_i32_0 = arith.constant 0 : i32
    %c0_i32_1 = arith.constant 0 : i32
    return %arg0, %c0_i32, %c0_i32_0 : i32, i32, i32
  }
}

</mosaic_0001>

<llo_original>
// kernel: _hybrid_loss_device.1
$region0: #{_hybrid_loss_device.1}
  #allocation0 [shape = 'u32[]', space=smem, size = 0x4, offset = 0x4, fixed_abs, tag = 'smem constant byte address 0x4 - core index']
  #allocation1 [shape = 'u32[144,128]{1,0:T(1,128)}', space=vmem, size = 0x12000, scoped, tag = 'internal scratch']
  %s0 = inlined_call_operand.vmem [shape: f32[4,3], index: 0, kind: input, shape index: {}]
  %s1 = inlined_call_operand.vmem [shape: bf16[4,4], index: 1, kind: input, shape index: {}]
  %s2 = inlined_call_operand.vmem [shape: f32[1,1,128], index: 2, kind: output, shape index: {0}]
  %s3 = inlined_call_operand.vmem [shape: f32[1,1,128], index: 3, kind: output, shape index: {1}]
  %4 = xla_tuple %s2, %s3
  %s5 = sld [smem:[#allocation0]]
  $region26: #{_hybrid_loss_device.1} parent=0
    _
  %s7 = ssub.s32 1, %s5
  %s8 = scalar_select 0, %s7, %s5
  // Predicated region
  $region2: #{_hybrid_loss_device.1} parent=0 // pred_check
    _
  $region3: #{_hybrid_loss_device.1} parent=0 // pred_check_branch
    %10 = sbr.rel (0) target = $region5
  $region4: #{_hybrid_loss_device.1} parent=0 // pred_region
    _
  $region5: #{_hybrid_loss_device.1} parent=0 // pred_fallthru
    _
  // Predicated region
  $region6: #{_hybrid_loss_device.1} parent=0 // pred_check
    _
  $region7: #{_hybrid_loss_device.1} parent=0 // pred_check_branch
    %12 = sbr.rel (0) target = $region9
  $region8: #{_hybrid_loss_device.1} parent=0 // pred_region
    _
  $region9: #{_hybrid_loss_device.1} parent=0 // pred_fallthru
    _
  %v13 = vld [vmem:[%s0] sm:$0xf]
  %v14 = vcvt.f32.s32.to.zero.pseudo %v13
  %v15 = vld [vmem:[%s1] sm:$0x3]
  %v16 = vunpack.c.l.bf16 %v15
  %vm17 = vcmask 27648
  %v18 = vsel %vm17, %v16, -inf
  %19 = vmax.xlane.f32.xlu0 %v18
  %v20 = vpop.xlane.xlu0 %19
  %v21 = vsub.f32 %v16, %v20
  %v22 = vlaneseq
  %v23 = vand.u32 %v22, 127
  %24 = vset.pattern.permute.xlu0 0
  %25 = vperm.xlu0 %24, %v14
  %v26 = vpop.permute.xlu0 %25
  %vm27 = vcmp.eq.s32.totalorder %v23, %v26
  %v28 = vsel %vm27, %v21, 0.0
  %v29 = vsel %vm17, %v28, 0.0
  %30 = vadd.xlane.f32.xlu0 %v29
  %v31 = vpop.xlane.xlu0 %30
  %v32 = vmul.f32 %v21, 1.442695
  %v33 = vpow.pop %v32
  %v34 = vsel %vm17, %v33, 0.0
  %35 = vadd.xlane.f32.xlu0 %v34
  %v36 = vpop.xlane.xlu0 %35
  %v37 = vlog2.pop %v36
  %v38 = vmul.f32 %v37, 0.6931472
  %v39 = vsub.f32 %v31, %v38
  %v40 = vmul.f32 %v13, %v39
  %42 = vrot.lane.b32.xlu0 %v40, 127
  %v43 = vpop.permute.xlu0 %42
  %vm45 = vcmask 3072
  %v46 = vsel %vm45, %v43, 0.0
  %47 = vadd.xlane.f32.xlu0 %v46
  %v48 = vpop.xlane.xlu0 %47
  %v49 = vrot.slane %v48, 4
  %v50 = vadd.f32 %v48, %v49
  %v51 = vrot.slane %v50, 2
  %v52 = vadd.f32 %v50, %v51
  %v53 = vrot.slane %v52, 1
  %v54 = vadd.f32 %v52, %v53
  %s55 = vtos %v54
  %s56 = ssub.f32 0.0, %s55
  %57 = vrot.lane.b32.xlu0 %v40, 126
  %v58 = vpop.permute.xlu0 %57
  %v60 = vsel %vm45, %v58, 0.0
  %61 = vadd.xlane.f32.xlu0 %v60
  %v62 = vpop.xlane.xlu0 %61
  %v63 = vrot.slane %v62, 4
  %v64 = vadd.f32 %v62, %v63
  %v65 = vrot.slane %v64, 2
  %v66 = vadd.f32 %v64, %v65
  %v67 = vrot.slane %v66, 1
  %v68 = vadd.f32 %v66, %v67
  %s69 = vtos %v68
  %s70 = ssub.f32 0.0, %s69
  %v71 = vstv %s56
  %72 = vst [vmem:[%s2] sm:$0x1] %v71
  %v73 = vstv %s70
  %74 = vst [vmem:[%s3] sm:$0x1] %v73
  // Predicated region
  $region10: #{_hybrid_loss_device.1} parent=0 // pred_check
    _
  $region11: #{_hybrid_loss_device.1} parent=0 // pred_check_branch
    %76 = sbr.rel (0) target = $region13
  $region12: #{_hybrid_loss_device.1} parent=0 // pred_region
    _
  $region13: #{_hybrid_loss_device.1} parent=0 // pred_fallthru
    _
  // Predicated region
  $region14: #{_hybrid_loss_device.1} parent=0 // pred_check
    _
  $region15: #{_hybrid_loss_device.1} parent=0 // pred_check_branch
    %78 = sbr.rel (0) target = $region17
  $region16: #{_hybrid_loss_device.1} parent=0 // pred_region
    _
  $region17: #{_hybrid_loss_device.1} parent=0 // pred_fallthru
    _
  // Predicated region
  $region18: #{_hybrid_loss_device.1} parent=0 // pred_check
    _
  $region19: #{_hybrid_loss_device.1} parent=0 // pred_check_branch
    %80 = sbr.rel (0) target = $region21
  $region20: #{_hybrid_loss_device.1} parent=0 // pred_region
    _
  $region21: #{_hybrid_loss_device.1} parent=0 // pred_fallthru
    _
  // Predicated region
  $region22: #{_hybrid_loss_device.1} parent=0 // pred_check
    _
  $region23: #{_hybrid_loss_device.1} parent=0 // pred_check_branch
    %82 = sbr.rel (0) target = $region25
  $region24: #{_hybrid_loss_device.1} parent=0 // pred_region
    _
  $region25: #{_hybrid_loss_device.1} parent=0 // pred_fallthru
    _

</llo_original>
